<compile_context>
chip_gen: v7x
topology: tpu7x:2x2x1
jax: 0.10.0
libtpu: 0.0.40
codegen_flags: <defaults>
</compile_context>

<pallas_src>
import jax
import jax.numpy as jnp
from jax.experimental import pallas as pl
from jax.experimental.pallas import tpu as pltpu

# ----------------------- synthetic hrnet_gcn config -----------------------
HIDDEN_DIM = 32
DEPTH = 4
SPLIT_INDICES = [0, 1]                 # "branches"
BOT_BRANCH_IDX = len(SPLIT_INDICES)    # = 2
INPUT_DIM = 16
OUTPUT_DIM = 8
NUM_NODES = 16
MIDDLE_DIM = (INPUT_DIM + HIDDEN_DIM) // 2   # 24

# Packed output slab layout (lane-dense, 2 x 128 lanes):
#   [0:32)    merged      (OutputBlock result, pre down-projection)
#   [32:64)   int_rep 1   (bot-branch tensor after depth-0 step)
#   [64:96)   int_rep 2
#   [96:128)  int_rep 3
#   [128:136) final       (down-projection output)
#   [136:256) zero padding
OUT_COLS = 256

# ------------------------- parameter-slab layout ---------------------------
# Weight slab: [280, 128] f32.  Each weight occupies rows [off, off+din), lanes [0, dout).
# All row offsets / extents are multiples of 8 (sublane aligned).
_R_P1 = 0        # proj1  [16, 24]
_R_P2 = 16       # proj2  [24, 32]
_R_BLK0 = 40     # block-diag(t00w [32,32] @ lanes 0:32, c0w [16,32] @ lanes 32:64) -> [48, 64]
_R_C1 = 88       # conv1  [32, 32]
_R_BLK1 = 120    # [t01w | t11w]                                            -> [32, 64]
_R_C2 = 152      # conv2  [32, 32]
_R_BLK2 = 184    # block-diag(t02w, t12w)                                   -> [64, 64]
_R_DOWN = 248    # down   [32, 8]
W_SLAB_ROWS = 280

# Bias slab: [16, 128] f32, one bias per row (lanes [0, dout)).
(_B_P1, _B_LNG, _B_LNB, _B_P2, _B_BLK0,
 _B_C1, _B_BLK1, _B_C2, _B_BLK2, _B_DOWN) = range(10)
B_SLAB_ROWS = 16


# ------------------------------ fused Pallas kernel ------------------------------
def _hrnet_fused_kernel(adj_ref, x_ref, w_ref, b_ref, out_ref):
    f32 = jnp.float32
    H = HIDDEN_DIM

    def mm(x, r0, din, dout, brow, relu):
        # Static ref slices: rows [r0, r0+din) (8-aligned), lanes [0, dout).
        y = jnp.dot(x, w_ref[r0:r0 + din, 0:dout], preferred_element_type=f32)
        y = y + b_ref[brow:brow + 1, 0:dout]
        return jnp.maximum(y, 0.0) if relu else y

    adj = adj_ref[...]
    x = x_ref[...]

    # ---------------- depth 0 ----------------
    # initial_projection_layer: Linear -> ReLU -> LayerNorm -> Linear
    h = mm(x, _R_P1, INPUT_DIM, MIDDLE_DIM, _B_P1, relu=True)
    mu = jnp.mean(h, axis=-1, keepdims=True)
    hc = h - mu                                   # hoisted: feeds both var and the normalization
    var = jnp.mean(hc * hc, axis=-1, keepdims=True)
    h = (hc * jax.lax.rsqrt(var + 1e-5) * b_ref[_B_LNG:_B_LNG + 1, 0:MIDDLE_DIM]
         + b_ref[_B_LNB:_B_LNB + 1, 0:MIDDLE_DIM])
    t0 = mm(h, _R_P2, MIDDLE_DIM, H, _B_P2, relu=False)

    # depth-0 normal step: branch-0 transform and bot-branch GCN second matmul are packed
    # into one block-diagonal [48,64] matmul (lanes 0:32 -> branch 0, lanes 32:64 -> bot).
    agg0 = jnp.dot(adj, x, preferred_element_type=f32)                       # A_hat @ X  [N,16]
    hh0 = mm(jnp.concatenate([t0, agg0], axis=-1),
             _R_BLK0, H + INPUT_DIM, 2 * H, _B_BLK0, relu=True)              # [N,64]
    d1 = hh0[:, H:2 * H]                                                     # int_reps[1]

    # ---------------- depth 1 ----------------
    # fuse: mean over current branches {0, bot}.  Lane slices stay inside one (8,128) tile.
    fused = 0.5 * (hh0[:, 0:H] + d1)
    agg1 = jnp.dot(adj, fused, preferred_element_type=f32)
    d2 = mm(agg1, _R_C1, H, H, _B_C1, relu=True)                             # int_reps[2]
    # branches 0 and 1 share the same input -> stay lane-packed: one [32,64] matmul
    hh1 = mm(fused, _R_BLK1, H, 2 * H, _B_BLK1, relu=True)                   # [N,64]

    # ---------------- depth 2 ----------------
    agg2 = jnp.dot(adj, d2, preferred_element_type=f32)
    d3 = mm(agg2, _R_C2, H, H, _B_C2, relu=True)                             # int_reps[3]
    # block-diagonal [64,64] weight keeps branches 0/1 packed through depth 2
    hh2 = mm(hh1, _R_BLK2, 2 * H, 2 * H, _B_BLK2, relu=True)                 # [N,64]

    # ---------------- output block + down projection ----------------
    merged = (hh2[:, 0:H] + hh2[:, H:2 * H] + d3) * (1.0 / 3.0)              # mean over branches
    final = mm(merged, _R_DOWN, H, OUTPUT_DIM, _B_DOWN, relu=False)

    # single unmasked lane-dense store of the whole [N, 256] slab
    pad = jnp.zeros((out_ref.shape[0], OUT_COLS - 4 * H - OUTPUT_DIM), f32)
    out_ref[...] = jnp.concatenate([merged, d1, d2, d3, final, pad], axis=-1)


# ------------------------------ parameters ------------------------------
def _lin_init(key, din, dout, scale=0.1):
    kw, kb = jax.random.split(key)
    w = scale * jax.random.normal(kw, (din, dout), jnp.float32)
    b = scale * jax.random.normal(kb, (dout,), jnp.float32)
    return w, b


def init_params(key):
    params = {}
    keys = jax.random.split(key, 64)
    ki = iter(range(64))

    # base_network: ConvBlock(input, hidden) + (depth-2) x ConvBlock(hidden, hidden)
    conv = [_lin_init(keys[next(ki)], INPUT_DIM, HIDDEN_DIM)]
    for _ in range(DEPTH - 2):
        conv.append(_lin_init(keys[next(ki)], HIDDEN_DIM, HIDDEN_DIM))
    params["conv"] = conv

    # transform_blocks[branch][depth] for depth in range(split_index, DEPTH)
    transform = {}
    for branch_index, split_index in enumerate(SPLIT_INDICES):
        branch = {}
        for d in range(split_index, DEPTH):
            branch[d] = _lin_init(keys[next(ki)], HIDDEN_DIM, HIDDEN_DIM)
        transform[branch_index] = branch
    params["transform"] = transform

    # initial_projection_layer (0 in split_indices)
    params["proj1"] = _lin_init(keys[next(ki)], INPUT_DIM, MIDDLE_DIM)
    params["ln_gamma"] = jnp.ones((MIDDLE_DIM,), jnp.float32)
    params["ln_beta"] = jnp.zeros((MIDDLE_DIM,), jnp.float32)
    params["proj2"] = _lin_init(keys[next(ki)], MIDDLE_DIM, HIDDEN_DIM)

    # down_projection
    params["down"] = _lin_init(keys[next(ki)], HIDDEN_DIM, OUTPUT_DIM)
    return params


def prepare_params(params):
    """One-time, host-side packing of every weight/bias into two lane-dense slabs.

    Runs OUTSIDE the jitted forward so no reshape/concat XLA ops sit on the hot path.
    """
    H = HIDDEN_DIM
    conv = params["conv"]
    t = params["transform"]

    def lane_pad(a):
        return jnp.pad(a, ((0, 0), (0, 128 - a.shape[1])))

    # depth-0 block-diag: transform[0][0] (lanes 0:32) + conv0 (lanes 32:64)
    wblk0 = jnp.zeros((H + INPUT_DIM, 2 * H), jnp.float32)
    wblk0 = wblk0.at[0:H, 0:H].set(t[0][0][0])
    wblk0 = wblk0.at[H:H + INPUT_DIM, H:2 * H].set(conv[0][0])

    # depth-1 packed transforms (branches 0|1 share their input)
    wblk1 = jnp.concatenate([t[0][1][0], t[1][1][0]], axis=1)               # [32, 64]

    # depth-2 block-diag keeps the branches lane-packed
    wblk2 = jnp.zeros((2 * H, 2 * H), jnp.float32)
    wblk2 = wblk2.at[0:H, 0:H].set(t[0][2][0])
    wblk2 = wblk2.at[H:2 * H, H:2 * H].set(t[1][2][0])

    w_slab = jnp.concatenate([
        lane_pad(params["proj1"][0]),   # rows   0: 16
        lane_pad(params["proj2"][0]),   # rows  16: 40
        lane_pad(wblk0),                # rows  40: 88
        lane_pad(conv[1][0]),           # rows  88:120
        lane_pad(wblk1),                # rows 120:152
        lane_pad(conv[2][0]),           # rows 152:184
        lane_pad(wblk2),                # rows 184:248
        lane_pad(params["down"][0]),    # rows 248:280
    ], axis=0)
    assert w_slab.shape == (W_SLAB_ROWS, 128)

    def brow(vecs):
        v = jnp.concatenate([jnp.asarray(a).reshape(-1) for a in vecs])
        return jnp.pad(v, (0, 128 - v.shape[0])).reshape(1, 128)

    b_slab = jnp.concatenate([
        brow([params["proj1"][1]]),                  # _B_P1
        brow([params["ln_gamma"]]),                  # _B_LNG
        brow([params["ln_beta"]]),                   # _B_LNB
        brow([params["proj2"][1]]),                  # _B_P2
        brow([t[0][0][1], conv[0][1]]),              # _B_BLK0  [t00b | c0b]
        brow([conv[1][1]]),                          # _B_C1
        brow([t[0][1][1], t[1][1][1]]),              # _B_BLK1  [t01b | t11b]
        brow([conv[2][1]]),                          # _B_C2
        brow([t[0][2][1], t[1][2][1]]),              # _B_BLK2  [t02b | t12b]
        brow([params["down"][1]]),                   # _B_DOWN
    ], axis=0)
    b_slab = jnp.pad(b_slab, ((0, B_SLAB_ROWS - b_slab.shape[0]), (0, 0)))
    assert b_slab.shape == (B_SLAB_ROWS, 128)
    return w_slab, b_slab


# ------------------------------ forward pass ------------------------------
def build_norm_adj(edge_index, num_nodes):
    # dense symmetric normalized adjacency with self loops:  D^-1/2 (A + I) D^-1/2
    # (host-side setup; computed ONCE per graph and passed into the jitted forward)
    src, dst = edge_index[0], edge_index[1]
    a = jnp.zeros((num_nodes, num_nodes), jnp.float32)
    a = a.at[dst, src].set(1.0)
    a = a.at[src, dst].set(1.0)
    a = a + jnp.eye(num_nodes, dtype=jnp.float32)
    a = jnp.minimum(a, 1.0)
    deg = jnp.sum(a, axis=1)
    dinv = jax.lax.rsqrt(deg)
    return a * dinv[:, None] * dinv[None, :]


def _static_flops(n):
    H, I, M, O = HIDDEN_DIM, INPUT_DIM, MIDDLE_DIM, OUTPUT_DIM
    f = 2 * n * I * M + 2 * n * M * H                                  # initial projection
    f += 2 * n * n * I + 2 * n * (H + I) * (2 * H)                     # depth 0 (A@X + block-diag)
    f += 2 * n * n * H + 2 * n * H * H + 2 * n * H * (2 * H)           # depth 1
    f += 2 * n * n * H + 2 * n * H * H + 2 * n * (2 * H) * (2 * H)     # depth 2
    f += 2 * n * H * O                                                  # down projection
    return int(f)


@jax.jit
def hrnet_gcn_forward(w_slab, b_slab, x, adj):
    n = x.shape[0]
    bytes_accessed = 4 * (adj.size + x.size + w_slab.size + b_slab.size + n * OUT_COLS)

    slab = pl.pallas_call(
        _hrnet_fused_kernel,
        out_shape=jax.ShapeDtypeStruct((n, OUT_COLS), jnp.float32),
        in_specs=[pl.BlockSpec(memory_space=pltpu.MemorySpace.VMEM)] * 4,
        out_specs=pl.BlockSpec(memory_space=pltpu.MemorySpace.VMEM),
        cost_estimate=pl.CostEstimate(
            flops=_static_flops(n),
            transcendentals=int(n),                  # one rsqrt lane-group per row (LayerNorm)
            bytes_accessed=int(bytes_accessed),
        ),
    )(adj, x, w_slab, b_slab)

    merged = slab[:, 0:HIDDEN_DIM]
    final = slab[:, 4 * HIDDEN_DIM:4 * HIDDEN_DIM + OUTPUT_DIM]
    int_reps = {
        "1": slab[:, HIDDEN_DIM:2 * HIDDEN_DIM],
        "2": slab[:, 2 * HIDDEN_DIM:3 * HIDDEN_DIM],
        "3": slab[:, 3 * HIDDEN_DIM:4 * HIDDEN_DIM],
        "merged": merged,
        "final": final,
    }
    return final, int_reps, {}


# ------------------------------ main ------------------------------
if __name__ == "__main__":
    key = jax.random.PRNGKey(0)
    k_param, k_x, _ = jax.random.split(key, 3)

    params = init_params(k_param)

    # node features
    x = jax.random.normal(k_x, (NUM_NODES, INPUT_DIM), jnp.float32)

    # deterministic edge_index: a ring plus a few chords
    src = jnp.arange(NUM_NODES, dtype=jnp.int32)
    dst = (src + 1) % NUM_NODES
    chord_src = jnp.array([0, 3, 5, 8], dtype=jnp.int32)
    chord_dst = jnp.array([7, 12, 10, 15], dtype=jnp.int32)
    edge_index = jnp.stack(
        [jnp.concatenate([src, chord_src]), jnp.concatenate([dst, chord_dst])], axis=0
    )

    # one-time host-side setup (outside the jitted hot path):
    adj = jax.block_until_ready(build_norm_adj(edge_index, NUM_NODES))
    w_slab, b_slab = jax.block_until_ready(prepare_params(params))

    out, int_reps, _ = hrnet_gcn_forward(w_slab, b_slab, x, adj)
    out = jax.block_until_ready(out)

    assert out.shape == (NUM_NODES, OUTPUT_DIM)
    assert int_reps["merged"].shape == (NUM_NODES, HIDDEN_DIM)
    assert int_reps["1"].shape == (NUM_NODES, HIDDEN_DIM)
    assert int_reps["3"].shape == (NUM_NODES, HIDDEN_DIM)
    print("KERNEL_OK")
</pallas_src>

<mosaic_0001>
module attributes {stable_mosaic.version = 11 : i64} {
  func.func @_hrnet_fused_kernel(%arg0: memref<16x16xf32, #tpu.memory_space<vmem>>, %arg1: memref<16x16xf32, #tpu.memory_space<vmem>>, %arg2: memref<280x128xf32, #tpu.memory_space<vmem>>, %arg3: memref<16x128xf32, #tpu.memory_space<vmem>>, %arg4: memref<16x256xf32, #tpu.memory_space<vmem>>) attributes {dimension_semantics = [], scalar_prefetch = 0 : i64, scratch_operands = 0 : i64, tpu.core_type = #tpu.core_type<tc>} {
    %c0 = arith.constant 0 : index
    %c0_0 = arith.constant 0 : index
    %0 = vector.load %arg0[%c0, %c0_0] : memref<16x16xf32, #tpu.memory_space<vmem>>, vector<16x16xf32>
    %c0_1 = arith.constant 0 : index
    %c0_2 = arith.constant 0 : index
    %1 = vector.load %arg1[%c0_1, %c0_2] : memref<16x16xf32, #tpu.memory_space<vmem>>, vector<16x16xf32>
    %c0_3 = arith.constant 0 : index
    %c0_4 = arith.constant 0 : index
    %2 = vector.load %arg2[%c0_3, %c0_4] : memref<280x128xf32, #tpu.memory_space<vmem>>, vector<16x24xf32>
    %cst = arith.constant dense<0.000000e+00> : vector<16x24xf32>
    %3 = tpu.matmul %1, %2, %cst {dimension_numbers = #tpu.dot_dimension_numbers<[1], [0], [0], [1], [0, 0, 1, 1], [], []>} : vector<16x16xf32>, vector<16x24xf32>, vector<16x24xf32> -> vector<16x24xf32>
    %c0_5 = arith.constant 0 : index
    %c0_6 = arith.constant 0 : index
    %4 = vector.load %arg3[%c0_5, %c0_6] : memref<16x128xf32, #tpu.memory_space<vmem>>, vector<1x24xf32>
    %5 = vector.broadcast %4 : vector<1x24xf32> to vector<16x24xf32>
    %6 = arith.addf %3, %5 : vector<16x24xf32>
    %cst_7 = arith.constant 0.000000e+00 : f32
    %7 = vector.broadcast %cst_7 : f32 to vector<16x24xf32>
    %8 = arith.maximumf %6, %7 : vector<16x24xf32>
    %cst_8 = arith.constant dense<0.000000e+00> : vector<16xf32>
    %9 = vector.multi_reduction <add>, %8, %cst_8 [1] : vector<16x24xf32> to vector<16xf32>
    %10 = vector.shape_cast %9 : vector<16xf32> to vector<16x1xf32>
    %cst_9 = arith.constant 2.400000e+01 : f32
    %11 = vector.broadcast %cst_9 : f32 to vector<16x1xf32>
    %12 = arith.divf %10, %11 : vector<16x1xf32>
    %13 = vector.broadcast %12 : vector<16x1xf32> to vector<16x24xf32>
    %14 = arith.subf %8, %13 : vector<16x24xf32>
    %15 = arith.mulf %14, %14 : vector<16x24xf32>
    %cst_10 = arith.constant dense<0.000000e+00> : vector<16xf32>
    %16 = vector.multi_reduction <add>, %15, %cst_10 [1] : vector<16x24xf32> to vector<16xf32>
    %17 = vector.shape_cast %16 : vector<16xf32> to vector<16x1xf32>
    %cst_11 = arith.constant 2.400000e+01 : f32
    %18 = vector.broadcast %cst_11 : f32 to vector<16x1xf32>
    %19 = arith.divf %17, %18 : vector<16x1xf32>
    %cst_12 = arith.constant 9.99999974E-6 : f32
    %20 = vector.broadcast %cst_12 : f32 to vector<16x1xf32>
    %21 = arith.addf %19, %20 : vector<16x1xf32>
    %22 = math.rsqrt %21 : vector<16x1xf32>
    %23 = vector.broadcast %22 : vector<16x1xf32> to vector<16x24xf32>
    %24 = arith.mulf %14, %23 : vector<16x24xf32>
    %c1 = arith.constant 1 : index
    %c0_13 = arith.constant 0 : index
    %25 = vector.load %arg3[%c1, %c0_13] : memref<16x128xf32, #tpu.memory_space<vmem>>, vector<1x24xf32>
    %26 = vector.broadcast %25 : vector<1x24xf32> to vector<16x24xf32>
    %27 = arith.mulf %24, %26 : vector<16x24xf32>
    %c2 = arith.constant 2 : index
    %c0_14 = arith.constant 0 : index
    %28 = vector.load %arg3[%c2, %c0_14] : memref<16x128xf32, #tpu.memory_space<vmem>>, vector<1x24xf32>
    %29 = vector.broadcast %28 : vector<1x24xf32> to vector<16x24xf32>
    %30 = arith.addf %27, %29 : vector<16x24xf32>
    %c16 = arith.constant 16 : index
    %c0_15 = arith.constant 0 : index
    %31 = vector.load %arg2[%c16, %c0_15] : memref<280x128xf32, #tpu.memory_space<vmem>>, vector<24x32xf32>
    %cst_16 = arith.constant dense<0.000000e+00> : vector<16x32xf32>
    %32 = tpu.matmul %30, %31, %cst_16 {dimension_numbers = #tpu.dot_dimension_numbers<[1], [0], [0], [1], [0, 0, 1, 1], [], []>} : vector<16x24xf32>, vector<24x32xf32>, vector<16x32xf32> -> vector<16x32xf32>
    %c3 = arith.constant 3 : index
    %c0_17 = arith.constant 0 : index
    %33 = vector.load %arg3[%c3, %c0_17] : memref<16x128xf32, #tpu.memory_space<vmem>>, vector<1x32xf32>
    %34 = vector.broadcast %33 : vector<1x32xf32> to vector<16x32xf32>
    %35 = arith.addf %32, %34 : vector<16x32xf32>
    %cst_18 = arith.constant dense<0.000000e+00> : vector<16x16xf32>
    %36 = tpu.matmul %0, %1, %cst_18 {dimension_numbers = #tpu.dot_dimension_numbers<[1], [0], [0], [1], [0, 0, 1, 1], [], []>} : vector<16x16xf32>, vector<16x16xf32>, vector<16x16xf32> -> vector<16x16xf32>
    %37 = tpu.concatenate %35, %36 in 1 : vector<16x32xf32>, vector<16x16xf32> -> vector<16x48xf32>
    %c40 = arith.constant 40 : index
    %c0_19 = arith.constant 0 : index
    %38 = vector.load %arg2[%c40, %c0_19] : memref<280x128xf32, #tpu.memory_space<vmem>>, vector<48x64xf32>
    %cst_20 = arith.constant dense<0.000000e+00> : vector<16x64xf32>
    %39 = tpu.matmul %37, %38, %cst_20 {dimension_numbers = #tpu.dot_dimension_numbers<[1], [0], [0], [1], [0, 0, 1, 1], [], []>} : vector<16x48xf32>, vector<48x64xf32>, vector<16x64xf32> -> vector<16x64xf32>
    %c4 = arith.constant 4 : index
    %c0_21 = arith.constant 0 : index
    %40 = vector.load %arg3[%c4, %c0_21] : memref<16x128xf32, #tpu.memory_space<vmem>>, vector<1x64xf32>
    %41 = vector.broadcast %40 : vector<1x64xf32> to vector<16x64xf32>
    %42 = arith.addf %39, %41 : vector<16x64xf32>
    %cst_22 = arith.constant 0.000000e+00 : f32
    %43 = vector.broadcast %cst_22 : f32 to vector<16x64xf32>
    %44 = arith.maximumf %42, %43 : vector<16x64xf32>
    %45 = vector.extract_strided_slice %44 {offsets = [0, 32], sizes = [16, 32], strides = [1, 1]} : vector<16x64xf32> to vector<16x32xf32>
    %46 = vector.extract_strided_slice %44 {offsets = [0, 0], sizes = [16, 32], strides = [1, 1]} : vector<16x64xf32> to vector<16x32xf32>
    %47 = arith.addf %46, %45 : vector<16x32xf32>
    %cst_23 = arith.constant 5.000000e-01 : f32
    %48 = vector.broadcast %cst_23 : f32 to vector<16x32xf32>
    %49 = arith.mulf %48, %47 : vector<16x32xf32>
    %cst_24 = arith.constant dense<0.000000e+00> : vector<16x32xf32>
    %50 = tpu.matmul %0, %49, %cst_24 {dimension_numbers = #tpu.dot_dimension_numbers<[1], [0], [0], [1], [0, 0, 1, 1], [], []>} : vector<16x16xf32>, vector<16x32xf32>, vector<16x32xf32> -> vector<16x32xf32>
    %c88 = arith.constant 88 : index
    %c0_25 = arith.constant 0 : index
    %51 = vector.load %arg2[%c88, %c0_25] : memref<280x128xf32, #tpu.memory_space<vmem>>, vector<32x32xf32>
    %cst_26 = arith.constant dense<0.000000e+00> : vector<16x32xf32>
    %52 = tpu.matmul %50, %51, %cst_26 {dimension_numbers = #tpu.dot_dimension_numbers<[1], [0], [0], [1], [0, 0, 1, 1], [], []>} : vector<16x32xf32>, vector<32x32xf32>, vector<16x32xf32> -> vector<16x32xf32>
    %c5 = arith.constant 5 : index
    %c0_27 = arith.constant 0 : index
    %53 = vector.load %arg3[%c5, %c0_27] : memref<16x128xf32, #tpu.memory_space<vmem>>, vector<1x32xf32>
    %54 = vector.broadcast %53 : vector<1x32xf32> to vector<16x32xf32>
    %55 = arith.addf %52, %54 : vector<16x32xf32>
    %cst_28 = arith.constant 0.000000e+00 : f32
    %56 = vector.broadcast %cst_28 : f32 to vector<16x32xf32>
    %57 = arith.maximumf %55, %56 : vector<16x32xf32>
    %c120 = arith.constant 120 : index
    %c0_29 = arith.constant 0 : index
    %58 = vector.load %arg2[%c120, %c0_29] : memref<280x128xf32, #tpu.memory_space<vmem>>, vector<32x64xf32>
    %cst_30 = arith.constant dense<0.000000e+00> : vector<16x64xf32>
    %59 = tpu.matmul %49, %58, %cst_30 {dimension_numbers = #tpu.dot_dimension_numbers<[1], [0], [0], [1], [0, 0, 1, 1], [], []>} : vector<16x32xf32>, vector<32x64xf32>, vector<16x64xf32> -> vector<16x64xf32>
    %c6 = arith.constant 6 : index
    %c0_31 = arith.constant 0 : index
    %60 = vector.load %arg3[%c6, %c0_31] : memref<16x128xf32, #tpu.memory_space<vmem>>, vector<1x64xf32>
    %61 = vector.broadcast %60 : vector<1x64xf32> to vector<16x64xf32>
    %62 = arith.addf %59, %61 : vector<16x64xf32>
    %cst_32 = arith.constant 0.000000e+00 : f32
    %63 = vector.broadcast %cst_32 : f32 to vector<16x64xf32>
    %64 = arith.maximumf %62, %63 : vector<16x64xf32>
    %cst_33 = arith.constant dense<0.000000e+00> : vector<16x32xf32>
    %65 = tpu.matmul %0, %57, %cst_33 {dimension_numbers = #tpu.dot_dimension_numbers<[1], [0], [0], [1], [0, 0, 1, 1], [], []>} : vector<16x16xf32>, vector<16x32xf32>, vector<16x32xf32> -> vector<16x32xf32>
    %c152 = arith.constant 152 : index
    %c0_34 = arith.constant 0 : index
    %66 = vector.load %arg2[%c152, %c0_34] : memref<280x128xf32, #tpu.memory_space<vmem>>, vector<32x32xf32>
    %cst_35 = arith.constant dense<0.000000e+00> : vector<16x32xf32>
    %67 = tpu.matmul %65, %66, %cst_35 {dimension_numbers = #tpu.dot_dimension_numbers<[1], [0], [0], [1], [0, 0, 1, 1], [], []>} : vector<16x32xf32>, vector<32x32xf32>, vector<16x32xf32> -> vector<16x32xf32>
    %c7 = arith.constant 7 : index
    %c0_36 = arith.constant 0 : index
    %68 = vector.load %arg3[%c7, %c0_36] : memref<16x128xf32, #tpu.memory_space<vmem>>, vector<1x32xf32>
    %69 = vector.broadcast %68 : vector<1x32xf32> to vector<16x32xf32>
    %70 = arith.addf %67, %69 : vector<16x32xf32>
    %cst_37 = arith.constant 0.000000e+00 : f32
    %71 = vector.broadcast %cst_37 : f32 to vector<16x32xf32>
    %72 = arith.maximumf %70, %71 : vector<16x32xf32>
    %c184 = arith.constant 184 : index
    %c0_38 = arith.constant 0 : index
    %73 = vector.load %arg2[%c184, %c0_38] : memref<280x128xf32, #tpu.memory_space<vmem>>, vector<64x64xf32>
    %cst_39 = arith.constant dense<0.000000e+00> : vector<16x64xf32>
    %74 = tpu.matmul %64, %73, %cst_39 {dimension_numbers = #tpu.dot_dimension_numbers<[1], [0], [0], [1], [0, 0, 1, 1], [], []>} : vector<16x64xf32>, vector<64x64xf32>, vector<16x64xf32> -> vector<16x64xf32>
    %c8 = arith.constant 8 : index
    %c0_40 = arith.constant 0 : index
    %75 = vector.load %arg3[%c8, %c0_40] : memref<16x128xf32, #tpu.memory_space<vmem>>, vector<1x64xf32>
    %76 = vector.broadcast %75 : vector<1x64xf32> to vector<16x64xf32>
    %77 = arith.addf %74, %76 : vector<16x64xf32>
    %cst_41 = arith.constant 0.000000e+00 : f32
    %78 = vector.broadcast %cst_41 : f32 to vector<16x64xf32>
    %79 = arith.maximumf %77, %78 : vector<16x64xf32>
    %80 = vector.extract_strided_slice %79 {offsets = [0, 0], sizes = [16, 32], strides = [1, 1]} : vector<16x64xf32> to vector<16x32xf32>
    %81 = vector.extract_strided_slice %79 {offsets = [0, 32], sizes = [16, 32], strides = [1, 1]} : vector<16x64xf32> to vector<16x32xf32>
    %82 = arith.addf %80, %81 : vector<16x32xf32>
    %83 = arith.addf %82, %72 : vector<16x32xf32>
    %cst_42 = arith.constant 0.333333343 : f32
    %84 = vector.broadcast %cst_42 : f32 to vector<16x32xf32>
    %85 = arith.mulf %83, %84 : vector<16x32xf32>
    %c248 = arith.constant 248 : index
    %c0_43 = arith.constant 0 : index
    %86 = vector.load %arg2[%c248, %c0_43] : memref<280x128xf32, #tpu.memory_space<vmem>>, vector<32x8xf32>
    %cst_44 = arith.constant dense<0.000000e+00> : vector<16x8xf32>
    %87 = tpu.matmul %85, %86, %cst_44 {dimension_numbers = #tpu.dot_dimension_numbers<[1], [0], [0], [1], [0, 0, 1, 1], [], []>} : vector<16x32xf32>, vector<32x8xf32>, vector<16x8xf32> -> vector<16x8xf32>
    %c9 = arith.constant 9 : index
    %c0_45 = arith.constant 0 : index
    %88 = vector.load %arg3[%c9, %c0_45] : memref<16x128xf32, #tpu.memory_space<vmem>>, vector<1x8xf32>
    %89 = vector.broadcast %88 : vector<1x8xf32> to vector<16x8xf32>
    %90 = arith.addf %87, %89 : vector<16x8xf32>
    %cst_46 = arith.constant 0.000000e+00 : f32
    %91 = vector.broadcast %cst_46 : f32 to vector<16x120xf32>
    %92 = tpu.concatenate %85, %45, %57, %72, %90, %91 in 1 : vector<16x32xf32>, vector<16x32xf32>, vector<16x32xf32>, vector<16x32xf32>, vector<16x8xf32>, vector<16x120xf32> -> vector<16x256xf32>
    %c0_47 = arith.constant 0 : index
    %c0_48 = arith.constant 0 : index
    %93 = vector.load %arg4[%c0_47, %c0_48] : memref<16x256xf32, #tpu.memory_space<vmem>>, vector<16x256xf32>
    tpu.vector_store %arg4[%c0_47, %c0_48], %92 {strides = array<i32>} : memref<16x256xf32, #tpu.memory_space<vmem>>, vector<16x256xf32>,
    return
  }
}

</mosaic_0001>

<llo_original>
// kernel: hrnet_gcn_forward.1
$region0: #{hrnet_gcn_forward.1}
  #allocation0 [shape = 'u32[]', space=smem, size = 0x4, offset = 0x4, fixed_abs, tag = 'smem constant byte address 0x4 - core index']
  #allocation1 [shape = 'u32[144,128]{1,0:T(1,128)}', space=vmem, size = 0x12000, scoped, tag = 'internal scratch']
  %s0 = inlined_call_operand.hbm [shape: f32[16,16], index: 0, kind: input, shape index: {}]
  %s1 = inlined_call_operand.hbm [shape: f32[16,16], index: 1, kind: input, shape index: {}]
  %s2 = inlined_call_operand.hbm [shape: f32[280,128], index: 2, kind: input, shape index: {}]
  %s3 = inlined_call_operand.hbm [shape: f32[16,128], index: 3, kind: input, shape index: {}]
  %s4 = inlined_call_operand.vmem [shape: f32[16,256], index: 4, kind: output, shape index: {}]
  %s5 = sld [smem:[#allocation0]]
  $region42: #{hrnet_gcn_forward.1} parent=0
    _
  %s7 = ssub.s32 1, %s5
  %s8 = scalar_select 0, %s7, %s5
  $region1: #{hrnet_gcn_forward.1} parent=0
    #allocation2 [shape = 'u8[8192]{0}', space=vmem, size = 0x2000, scoped, tag = 'input window, operand 0, single buffered']
    #allocation3 [shape = 's32[1]{0}', space=sflag, size = 0x4, scoped, tag = 'scoped memory for hrnet_gcn_forward.1']
    #allocation4 [shape = 'u8[8192]{0}', space=vmem, size = 0x2000, scoped, tag = 'input window, operand 1, single buffered']
    #allocation5 [shape = 's32[1]{0}', space=sflag, size = 0x4, scoped, tag = 'scoped memory for hrnet_gcn_forward.1']
    #allocation6 [shape = 'u8[143360]{0}', space=vmem, size = 0x23000, scoped, tag = 'input window, operand 2, single buffered']
    #allocation7 [shape = 'u8[8192]{0}', space=vmem, size = 0x2000, scoped, tag = 'input window, operand 3, single buffered']
    #allocation8 [shape = 's32[1]{0}', space=sflag, size = 0x4, scoped, tag = 'scoped memory for hrnet_gcn_forward.1']
    %9 = vsyncpa [#allocation3], 0
    %10 = vsyncpa [#allocation5], 0
    %11 = vsyncpa [#allocation8], 0
    // Predicated region
    $region2: #{hrnet_gcn_forward.1} parent=1 // pred_check
      _
    $region3: #{hrnet_gcn_forward.1} parent=1 // pred_check_branch
      %13 = sbr.rel (0) target = $region5
    $region4: #{hrnet_gcn_forward.1} parent=1 // pred_region
      %s15 = ssub.s32 256, 256
      %16 = vsyncadd [#allocation3], %s15
      %s17 = sshll.u32 [#allocation2], 4
      %s18 = int_to_ptr.vmem [resolvable:$true] %s17
      %23 = dma.hbm_to_vmem [thread:$0]  %s0, 256, %s18, [#allocation3], 128, 128, 8
    $region5: #{hrnet_gcn_forward.1} parent=1 // pred_fallthru
      _
    // Predicated region
    $region6: #{hrnet_gcn_forward.1} parent=1 // pred_check
      _
    $region7: #{hrnet_gcn_forward.1} parent=1 // pred_check_branch
      %25 = sbr.rel (0) target = $region9
    $region8: #{hrnet_gcn_forward.1} parent=1 // pred_region
      %s27 = ssub.s32 256, 256
      %28 = vsyncadd [#allocation5], %s27
      %s29 = sshll.u32 [#allocation4], 4
      %s30 = int_to_ptr.vmem [resolvable:$true] %s29
      %35 = dma.hbm_to_vmem [thread:$0]  %s1, 256, %s30, [#allocation5], 128, 128, 8
    $region9: #{hrnet_gcn_forward.1} parent=1 // pred_fallthru
      _
    // Predicated region
    $region10: #{hrnet_gcn_forward.1} parent=1 // pred_check
      _
    $region11: #{hrnet_gcn_forward.1} parent=1 // pred_check_branch
      %37 = sbr.rel (0) target = $region13
    $region12: #{hrnet_gcn_forward.1} parent=1 // pred_region
      %s39 = ssub.s32 4480, 4480
      %40 = vsyncadd [#allocation5], %s39
      %s41 = sshll.u32 [#allocation6], 4
      %s42 = int_to_ptr.vmem [resolvable:$true] %s41
      %47 = dma.hbm_to_vmem [thread:$0]  %s2, 4480, %s42, [#allocation5], 128, 128, 8
    $region13: #{hrnet_gcn_forward.1} parent=1 // pred_fallthru
      _
    // Predicated region
    $region14: #{hrnet_gcn_forward.1} parent=1 // pred_check
      _
    $region15: #{hrnet_gcn_forward.1} parent=1 // pred_check_branch
      %49 = sbr.rel (0) target = $region17
    $region16: #{hrnet_gcn_forward.1} parent=1 // pred_region
      %s51 = ssub.s32 256, 256
      %52 = vsyncadd [#allocation8], %s51
      %s53 = sshll.u32 [#allocation7], 4
      %s54 = int_to_ptr.vmem [resolvable:$true] %s53
      %59 = dma.hbm_to_vmem [thread:$0]  %s3, 256, %s54, [#allocation8], 128, 128, 8
    $region17: #{hrnet_gcn_forward.1} parent=1 // pred_fallthru
      _
    // Predicated region
    $region18: #{hrnet_gcn_forward.1} parent=1 // pred_check
      _
    $region19: #{hrnet_gcn_forward.1} parent=1 // pred_check_branch
      %61 = sbr.rel (0) target = $region21
    $region20: #{hrnet_gcn_forward.1} parent=1 // pred_region
      %62 = dma.done [#allocation3], 256
    $region21: #{hrnet_gcn_forward.1} parent=1 // pred_fallthru
      _
    // Predicated region
    $region22: #{hrnet_gcn_forward.1} parent=1 // pred_check
      _
    $region23: #{hrnet_gcn_forward.1} parent=1 // pred_check_branch
      %64 = sbr.rel (0) target = $region25
    $region24: #{hrnet_gcn_forward.1} parent=1 // pred_region
      %65 = dma.done [#allocation5], 256
    $region25: #{hrnet_gcn_forward.1} parent=1 // pred_fallthru
      _
    // Predicated region
    $region26: #{hrnet_gcn_forward.1} parent=1 // pred_check
      _
    $region27: #{hrnet_gcn_forward.1} parent=1 // pred_check_branch
      %67 = sbr.rel (0) target = $region29
    $region28: #{hrnet_gcn_forward.1} parent=1 // pred_region
      %68 = dma.done [#allocation5], 4480
    $region29: #{hrnet_gcn_forward.1} parent=1 // pred_fallthru
      _
    // Predicated region
    $region30: #{hrnet_gcn_forward.1} parent=1 // pred_check
      _
    $region31: #{hrnet_gcn_forward.1} parent=1 // pred_check_branch
      %70 = sbr.rel (0) target = $region33
    $region32: #{hrnet_gcn_forward.1} parent=1 // pred_region
      %71 = dma.done [#allocation8], 256
    $region33: #{hrnet_gcn_forward.1} parent=1 // pred_fallthru
      _
    %v72 = vld [vmem:[#allocation2] sm:$0xff]
    %v73 = vld [vmem:[#allocation2 + $0x8] sm:$0xff]
    %v74 = vld [vmem:[#allocation4] sm:$0xff]
    %v75 = vld [vmem:[#allocation4 + $0x8] sm:$0xff]
    %v76 = vld [vmem:[#allocation6] sm:$0xff]
    %v77 = vld [vmem:[#allocation6 + $0x8] sm:$0xff]
    %v78 = vld [vmem:[#allocation7] sm:$0x1]
    %v79 = vlaneseq
    %v80 = vshrl.u32 %v79, 7
    %v81 = vsub.s32 0, %v80
    %v82 = vrot.slane %v78, %v81
    %vm83 = vcmask 130048
    %v85 = vsel %vm83, %v74, 0
    %v88 = vsel %vm83, %v75, 0
    %90 = vmatprep.subr.mxu0 0.0
    %91 = vmatpush1.msra.mxu0 %v76
    %92 = vmatprep.subr.mxu0 0.0
    %93 = vmatpush1.msra.mxu0 %v77
    %94 = vmatprep.subr.mxu0 0.0
    %95 = vmatpush1.msra.mxu0 0.0
    %96 = vmatprep.subr.mxu0 0.0
    %97 = vmatpush1.msra.mxu0 0.0
    %98 = vmatprep.subr.mxu0 0.0
    %99 = vmatpush1.msra.mxu0 0.0
    %100 = vmatprep.subr.mxu0 0.0
    %101 = vmatpush1.msra.mxu0 0.0
    %102 = vmatprep.subr.mxu0 0.0
    %103 = vmatpush1.msra.mxu0 0.0
    %104 = vmatprep.subr.mxu0 0.0
    %105 = vmatpush1.msra.mxu0 0.0
    %106 = vmatprep.subr.mxu0 0.0
    %107 = vmatpush1.msra.mxu0 0.0
    %108 = vmatprep.subr.mxu0 0.0
    %109 = vmatpush1.msra.mxu0 0.0
    %110 = vmatprep.subr.mxu0 0.0
    %111 = vmatpush1.msra.mxu0 0.0
    %112 = vmatprep.subr.mxu0 0.0
    %113 = vmatpush1.msra.mxu0 0.0
    %114 = vmatprep.subr.mxu0 0.0
    %115 = vmatpush1.msra.mxu0 0.0
    %116 = vmatprep.subr.mxu0 0.0
    %117 = vmatpush1.msra.mxu0 0.0
    %118 = vmatprep.subr.mxu0 0.0
    %119 = vmatpush1.msra.mxu0 0.0
    %120 = vmatprep.subr.mxu0 0.0
    %121 = vmatpush1.msra.mxu0 0.0
    %122 = vmatprep.subr.mxu0 0.0
    %123 = vmatpush1.msra.mxu0 0.0
    %124 = vmatprep.subr.mxu0 0.0
    %125 = vmatpush1.msra.mxu0 0.0
    %126 = vmatprep.subr.mxu0 0.0
    %127 = vmatpush1.msra.mxu0 0.0
    %128 = vmatprep.subr.mxu0 0.0
    %129 = vmatpush1.msra.mxu0 0.0
    %130 = vmatprep.subr.mxu0 0.0
    %131 = vmatpush1.msra.mxu0 0.0
    %132 = vmatprep.subr.mxu0 0.0
    %133 = vmatpush1.msra.mxu0 0.0
    %134 = vmatprep.subr.mxu0 0.0
    %135 = vmatpush1.msra.mxu0 0.0
    %136 = vmatprep.subr.mxu0 0.0
    %137 = vmatpush1.msra.mxu0 0.0
    %138 = vmatprep.subr.mxu0 0.0
    %139 = vmatpush1.msra.mxu0 0.0
    %140 = vmatprep.subr.mxu0 0.0
    %141 = vmatpush1.msra.mxu0 0.0
    %142 = vmatprep.subr.mxu0 0.0
    %143 = vmatpush1.msra.mxu0 0.0
    %144 = vmatprep.subr.mxu0 0.0
    %145 = vmatpush1.msra.mxu0 0.0
    %146 = vmatprep.subr.mxu0 0.0
    %147 = vmatpush1.msra.mxu0 0.0
    %148 = vmatprep.subr.mxu0 0.0
    %149 = vmatpush1.msra.mxu0 0.0
    %150 = vmatprep.subr.mxu0 0.0
    %151 = vmatpush1.msra.mxu0 0.0
    %152 = vmatprep.subr.mxu0 0.0
    %153 = vmatpush1.msra.mxu0 0.0
    %154 = vmatprep.mubr.f32.mxu0 0.0
    %155 = vmatmul.mubr.f32.gmra.mrb[0].mxu0 %v85
    %v156 = vpop.f32.mrb[0].mxu0
    %v157 = vadd.f32 %v82, %v156
    %v158 = vpop.f32.mrb[0].mxu0
    %159 = vmatprep.mubr.f32.mxu0 0.0
    %160 = vmatmul.mubr.f32.gmra.mrb[0].mxu0 %v88
    %v161 = vpop.f32.mrb[0].mxu0
    %v162 = vadd.f32 %v82, %v161
    %v163 = vpop.f32.mrb[0].mxu0
    %164 = vdwg.mxu0
    %v165 = vmax.f32 %v157, 0.0
    %v166 = vmax.f32 %v162, 0.0
    %vm167 = vcmask 195584
    %v168 = vsel %vm167, %v165, 0.0
    %169 = vadd.xlane.f32.xlu0 %v168
    %v170 = vpop.xlane.xlu0 %169
    %v171 = vsel %vm167, %v166, 0.0
    %172 = vadd.xlane.f32.xlu0 %v171
    %v173 = vpop.xlane.xlu0 %172
    %v174 = vrcp.pop 24.0
    %v175 = vmul.f32 %v170, %v174
    %v176 = vmul.f32 %v173, %v174
    %v177 = vsub.f32 %v165, %v175
    %v178 = vsub.f32 %v166, %v176
    %v179 = vmul.f32 %v177, %v177
    %v180 = vmul.f32 %v178, %v178
    %v181 = vsel %vm167, %v179, 0.0
    %182 = vadd.xlane.f32.xlu0 %v181
    %v183 = vpop.xlane.xlu0 %182
    %v184 = vsel %vm167, %v180, 0.0
    %185 = vadd.xlane.f32.xlu0 %v184
    %v186 = vpop.xlane.xlu0 %185
    %v187 = vmul.f32 %v183, %v174
    %v188 = vmul.f32 %v186, %v174
    %v189 = vadd.f32 %v187, 1e-05
    %v190 = vadd.f32 %v188, 1e-05
    %v191 = vrsqrt.pop %v189
    %v192 = vrsqrt.pop %v190
    %v193 = vmul.f32 %v177, %v191
    %v194 = vmul.f32 %v178, %v192
    %v195 = vld [vmem:[#allocation7 + $0x1] sm:$0x1]
    %v196 = vlaneseq
    %v197 = vshrl.u32 %v196, 7
    %v198 = vsub.s32 0, %v197
    %v199 = vrot.slane %v195, %v198
    %v200 = vmul.f32 %v193, %v199
    %v201 = vmul.f32 %v194, %v199
    %v202 = vld [vmem:[#allocation7 + $0x2] sm:$0x1]
    %v203 = vlaneseq
    %v204 = vshrl.u32 %v203, 7
    %v205 = vsub.s32 0, %v204
    %v206 = vrot.slane %v202, %v205
    %v207 = vadd.f32 %v200, %v206
    %v208 = vadd.f32 %v201, %v206
    %v209 = vld [vmem:[#allocation6 + $0x10] sm:$0xff]
    %v210 = vld [vmem:[#allocation6 + $0x18] sm:$0xff]
    %v211 = vld [vmem:[#allocation6 + $0x20] sm:$0xff]
    %v212 = vld [vmem:[#allocation7 + $0x3] sm:$0x1]
    %v213 = vlaneseq
    %v214 = vshrl.u32 %v213, 7
    %v215 = vsub.s32 0, %v214
    %v216 = vrot.slane %v212, %v215
    %v218 = vsel %vm167, %v207, 0
    %v221 = vsel %vm167, %v208, 0
    %223 = vmatprep.subr.mxu0 0.0
    %224 = vmatpush1.msra.mxu0 %v209
    %225 = vmatprep.subr.mxu0 0.0
    %226 = vmatpush1.msra.mxu0 %v210
    %227 = vmatprep.subr.mxu0 0.0
    %228 = vmatpush1.msra.mxu0 %v211
    %229 = vmatprep.subr.mxu0 0.0
    %230 = vmatpush1.msra.mxu0 0.0
    %231 = vmatprep.subr.mxu0 0.0
    %232 = vmatpush1.msra.mxu0 0.0
    %233 = vmatprep.subr.mxu0 0.0
    %234 = vmatpush1.msra.mxu0 0.0
    %235 = vmatprep.subr.mxu0 0.0
    %236 = vmatpush1.msra.mxu0 0.0
    %237 = vmatprep.subr.mxu0 0.0
    %238 = vmatpush1.msra.mxu0 0.0
    %239 = vmatprep.subr.mxu0 0.0
    %240 = vmatpush1.msra.mxu0 0.0
    %241 = vmatprep.subr.mxu0 0.0
    %242 = vmatpush1.msra.mxu0 0.0
    %243 = vmatprep.subr.mxu0 0.0
    %244 = vmatpush1.msra.mxu0 0.0
    %245 = vmatprep.subr.mxu0 0.0
    %246 = vmatpush1.msra.mxu0 0.0
    %247 = vmatprep.subr.mxu0 0.0
    %248 = vmatpush1.msra.mxu0 0.0
    %249 = vmatprep.subr.mxu0 0.0
    %250 = vmatpush1.msra.mxu0 0.0
    %251 = vmatprep.subr.mxu0 0.0
    %252 = vmatpush1.msra.mxu0 0.0
    %253 = vmatprep.subr.mxu0 0.0
    %254 = vmatpush1.msra.mxu0 0.0
    %255 = vmatprep.subr.mxu0 0.0
    %256 = vmatpush1.msra.mxu0 0.0
    %257 = vmatprep.subr.mxu0 0.0
    %258 = vmatpush1.msra.mxu0 0.0
    %259 = vmatprep.subr.mxu0 0.0
    %260 = vmatpush1.msra.mxu0 0.0
    %261 = vmatprep.subr.mxu0 0.0
    %262 = vmatpush1.msra.mxu0 0.0
    %263 = vmatprep.subr.mxu0 0.0
    %264 = vmatpush1.msra.mxu0 0.0
    %265 = vmatprep.subr.mxu0 0.0
    %266 = vmatpush1.msra.mxu0 0.0
    %267 = vmatprep.subr.mxu0 0.0
    %268 = vmatpush1.msra.mxu0 0.0
    %269 = vmatprep.subr.mxu0 0.0
    %270 = vmatpush1.msra.mxu0 0.0
    %271 = vmatprep.subr.mxu0 0.0
    %272 = vmatpush1.msra.mxu0 0.0
    %273 = vmatprep.subr.mxu0 0.0
    %274 = vmatpush1.msra.mxu0 0.0
    %275 = vmatprep.subr.mxu0 0.0
    %276 = vmatpush1.msra.mxu0 0.0
    %277 = vmatprep.subr.mxu0 0.0
    %278 = vmatpush1.msra.mxu0 0.0
    %279 = vmatprep.subr.mxu0 0.0
    %280 = vmatpush1.msra.mxu0 0.0
    %281 = vmatprep.subr.mxu0 0.0
    %282 = vmatpush1.msra.mxu0 0.0
    %283 = vmatprep.subr.mxu0 0.0
    %284 = vmatpush1.msra.mxu0 0.0
    %285 = vmatprep.subr.mxu0 0.0
    %286 = vmatpush1.msra.mxu0 0.0
    %287 = vmatprep.mubr.f32.mxu0 0.0
    %288 = vmatmul.mubr.f32.gmra.mrb[0].mxu0 %v218
    %v289 = vpop.f32.mrb[0].mxu0
    %v290 = vadd.f32 %v216, %v289
    %v291 = vpop.f32.mrb[0].mxu0
    %292 = vmatprep.mubr.f32.mxu0 0.0
    %293 = vmatmul.mubr.f32.gmra.mrb[0].mxu0 %v221
    %v294 = vpop.f32.mrb[0].mxu0
    %v295 = vadd.f32 %v216, %v294
    %v296 = vpop.f32.mrb[0].mxu0
    %297 = vdwg.mxu0
    %v299 = vsel %vm83, %v72, 0
    %v302 = vsel %vm83, %v73, 0
    %304 = vmatprep.subr.mxu0 0.0
    %305 = vmatpush1.msra.mxu0 %v74
    %306 = vmatprep.subr.mxu0 0.0
    %307 = vmatpush1.msra.mxu0 %v75
    %308 = vmatprep.subr.mxu0 0.0
    %309 = vmatpush1.msra.mxu0 0.0
    %310 = vmatprep.subr.mxu0 0.0
    %311 = vmatpush1.msra.mxu0 0.0
    %312 = vmatprep.subr.mxu0 0.0
    %313 = vmatpush1.msra.mxu0 0.0
    %314 = vmatprep.subr.mxu0 0.0
    %315 = vmatpush1.msra.mxu0 0.0
    %316 = vmatprep.subr.mxu0 0.0
    %317 = vmatpush1.msra.mxu0 0.0
    %318 = vmatprep.subr.mxu0 0.0
    %319 = vmatpush1.msra.mxu0 0.0
    %320 = vmatprep.subr.mxu0 0.0
    %321 = vmatpush1.msra.mxu0 0.0
    %322 = vmatprep.subr.mxu0 0.0
    %323 = vmatpush1.msra.mxu0 0.0
    %324 = vmatprep.subr.mxu0 0.0
    %325 = vmatpush1.msra.mxu0 0.0
    %326 = vmatprep.subr.mxu0 0.0
    %327 = vmatpush1.msra.mxu0 0.0
    %328 = vmatprep.subr.mxu0 0.0
    %329 = vmatpush1.msra.mxu0 0.0
    %330 = vmatprep.subr.mxu0 0.0
    %331 = vmatpush1.msra.mxu0 0.0
    %332 = vmatprep.subr.mxu0 0.0
    %333 = vmatpush1.msra.mxu0 0.0
    %334 = vmatprep.subr.mxu0 0.0
    %335 = vmatpush1.msra.mxu0 0.0
    %336 = vmatprep.subr.mxu0 0.0
    %337 = vmatpush1.msra.mxu0 0.0
    %338 = vmatprep.subr.mxu0 0.0
    %339 = vmatpush1.msra.mxu0 0.0
    %340 = vmatprep.subr.mxu0 0.0
    %341 = vmatpush1.msra.mxu0 0.0
    %342 = vmatprep.subr.mxu0 0.0
    %343 = vmatpush1.msra.mxu0 0.0
    %344 = vmatprep.subr.mxu0 0.0
    %345 = vmatpush1.msra.mxu0 0.0
    %346 = vmatprep.subr.mxu0 0.0
    %347 = vmatpush1.msra.mxu0 0.0
    %348 = vmatprep.subr.mxu0 0.0
    %349 = vmatpush1.msra.mxu0 0.0
    %350 = vmatprep.subr.mxu0 0.0
    %351 = vmatpush1.msra.mxu0 0.0
    %352 = vmatprep.subr.mxu0 0.0
    %353 = vmatpush1.msra.mxu0 0.0
    %354 = vmatprep.subr.mxu0 0.0
    %355 = vmatpush1.msra.mxu0 0.0
    %356 = vmatprep.subr.mxu0 0.0
    %357 = vmatpush1.msra.mxu0 0.0
    %358 = vmatprep.subr.mxu0 0.0
    %359 = vmatpush1.msra.mxu0 0.0
    %360 = vmatprep.subr.mxu0 0.0
    %361 = vmatpush1.msra.mxu0 0.0
    %362 = vmatprep.subr.mxu0 0.0
    %363 = vmatpush1.msra.mxu0 0.0
    %364 = vmatprep.subr.mxu0 0.0
    %365 = vmatpush1.msra.mxu0 0.0
    %366 = vmatprep.subr.mxu0 0.0
    %367 = vmatpush1.msra.mxu0 0.0
    %368 = vmatprep.mubr.f32.mxu0 0.0
    %369 = vmatmul.mubr.f32.gmra.mrb[0].mxu0 %v299
    %v370 = vpop.f32.mrb[0].mxu0
    %v371 = vadd.f32 0.0, %v370
    %v372 = vpop.f32.mrb[0].mxu0
    %373 = vmatprep.mubr.f32.mxu0 0.0
    %374 = vmatmul.mubr.f32.gmra.mrb[0].mxu0 %v302
    %v375 = vpop.f32.mrb[0].mxu0
    %v376 = vadd.f32 0.0, %v375
    %v377 = vpop.f32.mrb[0].mxu0
    %378 = vdwg.mxu0
    %381 = vrot.lane.b32.xlu0 %v371, 32
    %v382 = vpop.permute.xlu0 %381
    %383 = vrot.lane.b32.xlu0 %v376, 32
    %v384 = vpop.permute.xlu0 %383
    %vm387 = vcmask 261120
    %v388 = vsel %vm387, %v290, %v382
    %v389 = vsel %vm387, %v295, %v384
    %v390 = vld [vmem:[#allocation6 + $0x28] sm:$0xff]
    %v391 = vld [vmem:[#allocation6 + $0x30] sm:$0xff]
    %v392 = vld [vmem:[#allocation6 + $0x38] sm:$0xff]
    %v393 = vld [vmem:[#allocation6 + $0x40] sm:$0xff]
    %v394 = vld [vmem:[#allocation6 + $0x48] sm:$0xff]
    %v395 = vld [vmem:[#allocation6 + $0x50] sm:$0xff]
    %v396 = vld [vmem:[#allocation7 + $0x4] sm:$0x1]
    %v397 = vlaneseq
    %v398 = vshrl.u32 %v397, 7
    %v399 = vsub.s32 0, %v398
    %v400 = vrot.slane %v396, %v399
    %vm401 = vcmask 392192
    %v403 = vsel %vm401, %v388, 0
    %v406 = vsel %vm401, %v389, 0
    %408 = vmatprep.subr.mxu0 0.0
    %409 = vmatpush1.msra.mxu0 %v390
    %410 = vmatprep.subr.mxu0 0.0
    %411 = vmatpush1.msra.mxu0 %v391
    %412 = vmatprep.subr.mxu0 0.0
    %413 = vmatpush1.msra.mxu0 %v392
    %414 = vmatprep.subr.mxu0 0.0
    %415 = vmatpush1.msra.mxu0 %v393
    %416 = vmatprep.subr.mxu0 0.0
    %417 = vmatpush1.msra.mxu0 %v394
    %418 = vmatprep.subr.mxu0 0.0
    %419 = vmatpush1.msra.mxu0 %v395
    %420 = vmatprep.subr.mxu0 0.0
    %421 = vmatpush1.msra.mxu0 0.0
    %422 = vmatprep.subr.mxu0 0.0
    %423 = vmatpush1.msra.mxu0 0.0
    %424 = vmatprep.subr.mxu0 0.0
    %425 = vmatpush1.msra.mxu0 0.0
    %426 = vmatprep.subr.mxu0 0.0
    %427 = vmatpush1.msra.mxu0 0.0
    %428 = vmatprep.subr.mxu0 0.0
    %429 = vmatpush1.msra.mxu0 0.0
    %430 = vmatprep.subr.mxu0 0.0
    %431 = vmatpush1.msra.mxu0 0.0
    %432 = vmatprep.subr.mxu0 0.0
    %433 = vmatpush1.msra.mxu0 0.0
    %434 = vmatprep.subr.mxu0 0.0
    %435 = vmatpush1.msra.mxu0 0.0
    %436 = vmatprep.subr.mxu0 0.0
    %437 = vmatpush1.msra.mxu0 0.0
    %438 = vmatprep.subr.mxu0 0.0
    %439 = vmatpush1.msra.mxu0 0.0
    %440 = vmatprep.subr.mxu0 0.0
    %441 = vmatpush1.msra.mxu0 0.0
    %442 = vmatprep.subr.mxu0 0.0
    %443 = vmatpush1.msra.mxu0 0.0
    %444 = vmatprep.subr.mxu0 0.0
    %445 = vmatpush1.msra.mxu0 0.0
    %446 = vmatprep.subr.mxu0 0.0
    %447 = vmatpush1.msra.mxu0 0.0
    %448 = vmatprep.subr.mxu0 0.0
    %449 = vmatpush1.msra.mxu0 0.0
    %450 = vmatprep.subr.mxu0 0.0
    %451 = vmatpush1.msra.mxu0 0.0
    %452 = vmatprep.subr.mxu0 0.0
    %453 = vmatpush1.msra.mxu0 0.0
    %454 = vmatprep.subr.mxu0 0.0
    %455 = vmatpush1.msra.mxu0 0.0
    %456 = vmatprep.subr.mxu0 0.0
    %457 = vmatpush1.msra.mxu0 0.0
    %458 = vmatprep.subr.mxu0 0.0
    %459 = vmatpush1.msra.mxu0 0.0
    %460 = vmatprep.subr.mxu0 0.0
    %461 = vmatpush1.msra.mxu0 0.0
    %462 = vmatprep.subr.mxu0 0.0
    %463 = vmatpush1.msra.mxu0 0.0
    %464 = vmatprep.subr.mxu0 0.0
    %465 = vmatpush1.msra.mxu0 0.0
    %466 = vmatprep.subr.mxu0 0.0
    %467 = vmatpush1.msra.mxu0 0.0
    %468 = vmatprep.subr.mxu0 0.0
    %469 = vmatpush1.msra.mxu0 0.0
    %470 = vmatprep.subr.mxu0 0.0
    %471 = vmatpush1.msra.mxu0 0.0
    %472 = vmatprep.mubr.f32.mxu0 0.0
    %473 = vmatmul.mubr.f32.gmra.mrb[0].mxu0 %v403
    %v474 = vpop.f32.mrb[0].mxu0
    %v475 = vadd.f32 %v400, %v474
    %v476 = vpop.f32.mrb[0].mxu0
    %477 = vmatprep.mubr.f32.mxu0 0.0
    %478 = vmatmul.mubr.f32.gmra.mrb[0].mxu0 %v406
    %v479 = vpop.f32.mrb[0].mxu0
    %v480 = vadd.f32 %v400, %v479
    %v481 = vpop.f32.mrb[0].mxu0
    %482 = vdwg.mxu0
    %v483 = vmax.f32 %v475, 0.0
    %v484 = vmax.f32 %v480, 0.0
    %487 = vrot.lane.b32.xlu0 %v483, 96
    %v488 = vpop.permute.xlu0 %487
    %489 = vrot.lane.b32.xlu0 %v484, 96
    %v490 = vpop.permute.xlu0 %489
    %v493 = vadd.f32 %v483, %v488
    %v494 = vadd.f32 %v484, %v490
    %v495 = vmul.f32 %v493, 0.5
    %v496 = vmul.f32 %v494, 0.5
    %497 = vmatprep.subr.mxu0 0.0
    %498 = vmatpush1.msra.mxu0 %v495
    %499 = vmatprep.subr.mxu0 0.0
    %500 = vmatpush1.msra.mxu0 %v496
    %501 = vmatprep.subr.mxu0 0.0
    %502 = vmatpush1.msra.mxu0 0.0
    %503 = vmatprep.subr.mxu0 0.0
    %504 = vmatpush1.msra.mxu0 0.0
    %505 = vmatprep.subr.mxu0 0.0
    %506 = vmatpush1.msra.mxu0 0.0
    %507 = vmatprep.subr.mxu0 0.0
    %508 = vmatpush1.msra.mxu0 0.0
    %509 = vmatprep.subr.mxu0 0.0
    %510 = vmatpush1.msra.mxu0 0.0
    %511 = vmatprep.subr.mxu0 0.0
    %512 = vmatpush1.msra.mxu0 0.0
    %513 = vmatprep.subr.mxu0 0.0
    %514 = vmatpush1.msra.mxu0 0.0
    %515 = vmatprep.subr.mxu0 0.0
    %516 = vmatpush1.msra.mxu0 0.0
    %517 = vmatprep.subr.mxu0 0.0
    %518 = vmatpush1.msra.mxu0 0.0
    %519 = vmatprep.subr.mxu0 0.0
    %520 = vmatpush1.msra.mxu0 0.0
    %521 = vmatprep.subr.mxu0 0.0
    %522 = vmatpush1.msra.mxu0 0.0
    %523 = vmatprep.subr.mxu0 0.0
    %524 = vmatpush1.msra.mxu0 0.0
    %525 = vmatprep.subr.mxu0 0.0
    %526 = vmatpush1.msra.mxu0 0.0
    %527 = vmatprep.subr.mxu0 0.0
    %528 = vmatpush1.msra.mxu0 0.0
    %529 = vmatprep.subr.mxu0 0.0
    %530 = vmatpush1.msra.mxu0 0.0
    %531 = vmatprep.subr.mxu0 0.0
    %532 = vmatpush1.msra.mxu0 0.0
    %533 = vmatprep.subr.mxu0 0.0
    %534 = vmatpush1.msra.mxu0 0.0
    %535 = vmatprep.subr.mxu0 0.0
    %536 = vmatpush1.msra.mxu0 0.0
    %537 = vmatprep.subr.mxu0 0.0
    %538 = vmatpush1.msra.mxu0 0.0
    %539 = vmatprep.subr.mxu0 0.0
    %540 = vmatpush1.msra.mxu0 0.0
    %541 = vmatprep.subr.mxu0 0.0
    %542 = vmatpush1.msra.mxu0 0.0
    %543 = vmatprep.subr.mxu0 0.0
    %544 = vmatpush1.msra.mxu0 0.0
    %545 = vmatprep.subr.mxu0 0.0
    %546 = vmatpush1.msra.mxu0 0.0
    %547 = vmatprep.subr.mxu0 0.0
    %548 = vmatpush1.msra.mxu0 0.0
    %549 = vmatprep.subr.mxu0 0.0
    %550 = vmatpush1.msra.mxu0 0.0
    %551 = vmatprep.subr.mxu0 0.0
    %552 = vmatpush1.msra.mxu0 0.0
    %553 = vmatprep.subr.mxu0 0.0
    %554 = vmatpush1.msra.mxu0 0.0
    %555 = vmatprep.subr.mxu0 0.0
    %556 = vmatpush1.msra.mxu0 0.0
    %557 = vmatprep.subr.mxu0 0.0
    %558 = vmatpush1.msra.mxu0 0.0
    %559 = vmatprep.subr.mxu0 0.0
    %560 = vmatpush1.msra.mxu0 0.0
    %561 = vmatprep.mubr.f32.mxu0 0.0
    %562 = vmatmul.mubr.f32.gmra.mrb[0].mxu0 %v299
    %v563 = vpop.f32.mrb[0].mxu0
    %v564 = vadd.f32 0.0, %v563
    %v565 = vpop.f32.mrb[0].mxu0
    %566 = vmatprep.mubr.f32.mxu0 0.0
    %567 = vmatmul.mubr.f32.gmra.mrb[0].mxu0 %v302
    %v568 = vpop.f32.mrb[0].mxu0
    %v569 = vadd.f32 0.0, %v568
    %v570 = vpop.f32.mrb[0].mxu0
    %571 = vdwg.mxu0
    %v572 = vld [vmem:[#allocation6 + $0x58] sm:$0xff]
    %v573 = vld [vmem:[#allocation6 + $0x60] sm:$0xff]
    %v574 = vld [vmem:[#allocation6 + $0x68] sm:$0xff]
    %v575 = vld [vmem:[#allocation6 + $0x70] sm:$0xff]
    %v576 = vld [vmem:[#allocation7 + $0x5] sm:$0x1]
    %v577 = vlaneseq
    %v578 = vshrl.u32 %v577, 7
    %v579 = vsub.s32 0, %v578
    %v580 = vrot.slane %v576, %v579
    %v582 = vsel %vm387, %v564, 0
    %v585 = vsel %vm387, %v569, 0
    %587 = vmatprep.subr.mxu0 0.0
    %588 = vmatpush1.msra.mxu0 %v572
    %589 = vmatprep.subr.mxu0 0.0
    %590 = vmatpush1.msra.mxu0 %v573
    %591 = vmatprep.subr.mxu0 0.0
    %592 = vmatpush1.msra.mxu0 %v574
    %593 = vmatprep.subr.mxu0 0.0
    %594 = vmatpush1.msra.mxu0 %v575
    %595 = vmatprep.subr.mxu0 0.0
    %596 = vmatpush1.msra.mxu0 0.0
    %597 = vmatprep.subr.mxu0 0.0
    %598 = vmatpush1.msra.mxu0 0.0
    %599 = vmatprep.subr.mxu0 0.0
    %600 = vmatpush1.msra.mxu0 0.0
    %601 = vmatprep.subr.mxu0 0.0
    %602 = vmatpush1.msra.mxu0 0.0
    %603 = vmatprep.subr.mxu0 0.0
    %604 = vmatpush1.msra.mxu0 0.0
    %605 = vmatprep.subr.mxu0 0.0
    %606 = vmatpush1.msra.mxu0 0.0
    %607 = vmatprep.subr.mxu0 0.0
    %608 = vmatpush1.msra.mxu0 0.0
    %609 = vmatprep.subr.mxu0 0.0
    %610 = vmatpush1.msra.mxu0 0.0
    %611 = vmatprep.subr.mxu0 0.0
    %612 = vmatpush1.msra.mxu0 0.0
    %613 = vmatprep.subr.mxu0 0.0
    %614 = vmatpush1.msra.mxu0 0.0
    %615 = vmatprep.subr.mxu0 0.0
    %616 = vmatpush1.msra.mxu0 0.0
    %617 = vmatprep.subr.mxu0 0.0
    %618 = vmatpush1.msra.mxu0 0.0
    %619 = vmatprep.subr.mxu0 0.0
    %620 = vmatpush1.msra.mxu0 0.0
    %621 = vmatprep.subr.mxu0 0.0
    %622 = vmatpush1.msra.mxu0 0.0
    %623 = vmatprep.subr.mxu0 0.0
    %624 = vmatpush1.msra.mxu0 0.0
    %625 = vmatprep.subr.mxu0 0.0
    %626 = vmatpush1.msra.mxu0 0.0
    %627 = vmatprep.subr.mxu0 0.0
    %628 = vmatpush1.msra.mxu0 0.0
    %629 = vmatprep.subr.mxu0 0.0
    %630 = vmatpush1.msra.mxu0 0.0
    %631 = vmatprep.subr.mxu0 0.0
    %632 = vmatpush1.msra.mxu0 0.0
    %633 = vmatprep.subr.mxu0 0.0
    %634 = vmatpush1.msra.mxu0 0.0
    %635 = vmatprep.subr.mxu0 0.0
    %636 = vmatpush1.msra.mxu0 0.0
    %637 = vmatprep.subr.mxu0 0.0
    %638 = vmatpush1.msra.mxu0 0.0
    %639 = vmatprep.subr.mxu0 0.0
    %640 = vmatpush1.msra.mxu0 0.0
    %641 = vmatprep.subr.mxu0 0.0
    %642 = vmatpush1.msra.mxu0 0.0
    %643 = vmatprep.subr.mxu0 0.0
    %644 = vmatpush1.msra.mxu0 0.0
    %645 = vmatprep.subr.mxu0 0.0
    %646 = vmatpush1.msra.mxu0 0.0
    %647 = vmatprep.subr.mxu0 0.0
    %648 = vmatpush1.msra.mxu0 0.0
    %649 = vmatprep.subr.mxu0 0.0
    %650 = vmatpush1.msra.mxu0 0.0
    %651 = vmatprep.mubr.f32.mxu0 0.0
    %652 = vmatmul.mubr.f32.gmra.mrb[0].mxu0 %v582
    %v653 = vpop.f32.mrb[0].mxu0
    %v654 = vadd.f32 %v580, %v653
    %v655 = vpop.f32.mrb[0].mxu0
    %656 = vmatprep.mubr.f32.mxu0 0.0
    %657 = vmatmul.mubr.f32.gmra.mrb[0].mxu0 %v585
    %v658 = vpop.f32.mrb[0].mxu0
    %v659 = vadd.f32 %v580, %v658
    %v660 = vpop.f32.mrb[0].mxu0
    %661 = vdwg.mxu0
    %v662 = vmax.f32 %v654, 0.0
    %v663 = vmax.f32 %v659, 0.0
    %v664 = vld [vmem:[#allocation6 + $0x78] sm:$0xff]
    %v665 = vld [vmem:[#allocation6 + $0x80] sm:$0xff]
    %v666 = vld [vmem:[#allocation6 + $0x88] sm:$0xff]
    %v667 = vld [vmem:[#allocation6 + $0x90] sm:$0xff]
    %v668 = vld [vmem:[#allocation7 + $0x6] sm:$0x1]
    %v669 = vlaneseq
    %v670 = vshrl.u32 %v669, 7
    %v671 = vsub.s32 0, %v670
    %v672 = vrot.slane %v668, %v671
    %v674 = vsel %vm387, %v495, 0
    %v677 = vsel %vm387, %v496, 0
    %679 = vmatprep.subr.mxu0 0.0
    %680 = vmatpush1.msra.mxu0 %v664
    %681 = vmatprep.subr.mxu0 0.0
    %682 = vmatpush1.msra.mxu0 %v665
    %683 = vmatprep.subr.mxu0 0.0
    %684 = vmatpush1.msra.mxu0 %v666
    %685 = vmatprep.subr.mxu0 0.0
    %686 = vmatpush1.msra.mxu0 %v667
    %687 = vmatprep.subr.mxu0 0.0
    %688 = vmatpush1.msra.mxu0 0.0
    %689 = vmatprep.subr.mxu0 0.0
    %690 = vmatpush1.msra.mxu0 0.0
    %691 = vmatprep.subr.mxu0 0.0
    %692 = vmatpush1.msra.mxu0 0.0
    %693 = vmatprep.subr.mxu0 0.0
    %694 = vmatpush1.msra.mxu0 0.0
    %695 = vmatprep.subr.mxu0 0.0
    %696 = vmatpush1.msra.mxu0 0.0
    %697 = vmatprep.subr.mxu0 0.0
    %698 = vmatpush1.msra.mxu0 0.0
    %699 = vmatprep.subr.mxu0 0.0
    %700 = vmatpush1.msra.mxu0 0.0
    %701 = vmatprep.subr.mxu0 0.0
    %702 = vmatpush1.msra.mxu0 0.0
    %703 = vmatprep.subr.mxu0 0.0
    %704 = vmatpush1.msra.mxu0 0.0
    %705 = vmatprep.subr.mxu0 0.0
    %706 = vmatpush1.msra.mxu0 0.0
    %707 = vmatprep.subr.mxu0 0.0
    %708 = vmatpush1.msra.mxu0 0.0
    %709 = vmatprep.subr.mxu0 0.0
    %710 = vmatpush1.msra.mxu0 0.0
    %711 = vmatprep.subr.mxu0 0.0
    %712 = vmatpush1.msra.mxu0 0.0
    %713 = vmatprep.subr.mxu0 0.0
    %714 = vmatpush1.msra.mxu0 0.0
    %715 = vmatprep.subr.mxu0 0.0
    %716 = vmatpush1.msra.mxu0 0.0
    %717 = vmatprep.subr.mxu0 0.0
    %718 = vmatpush1.msra.mxu0 0.0
    %719 = vmatprep.subr.mxu0 0.0
    %720 = vmatpush1.msra.mxu0 0.0
    %721 = vmatprep.subr.mxu0 0.0
    %722 = vmatpush1.msra.mxu0 0.0
    %723 = vmatprep.subr.mxu0 0.0
    %724 = vmatpush1.msra.mxu0 0.0
    %725 = vmatprep.subr.mxu0 0.0
    %726 = vmatpush1.msra.mxu0 0.0
    %727 = vmatprep.subr.mxu0 0.0
    %728 = vmatpush1.msra.mxu0 0.0
    %729 = vmatprep.subr.mxu0 0.0
    %730 = vmatpush1.msra.mxu0 0.0
    %731 = vmatprep.subr.mxu0 0.0
    %732 = vmatpush1.msra.mxu0 0.0
    %733 = vmatprep.subr.mxu0 0.0
    %734 = vmatpush1.msra.mxu0 0.0
    %735 = vmatprep.subr.mxu0 0.0
    %736 = vmatpush1.msra.mxu0 0.0
    %737 = vmatprep.subr.mxu0 0.0
    %738 = vmatpush1.msra.mxu0 0.0
    %739 = vmatprep.subr.mxu0 0.0
    %740 = vmatpush1.msra.mxu0 0.0
    %741 = vmatprep.subr.mxu0 0.0
    %742 = vmatpush1.msra.mxu0 0.0
    %743 = vmatprep.mubr.f32.mxu0 0.0
    %744 = vmatmul.mubr.f32.gmra.mrb[0].mxu0 %v674
    %v745 = vpop.f32.mrb[0].mxu0
    %v746 = vadd.f32 %v672, %v745
    %v747 = vpop.f32.mrb[0].mxu0
    %748 = vmatprep.mubr.f32.mxu0 0.0
    %749 = vmatmul.mubr.f32.gmra.mrb[0].mxu0 %v677
    %v750 = vpop.f32.mrb[0].mxu0
    %v751 = vadd.f32 %v672, %v750
    %v752 = vpop.f32.mrb[0].mxu0
    %753 = vdwg.mxu0
    %v754 = vmax.f32 %v746, 0.0
    %v755 = vmax.f32 %v751, 0.0
    %756 = vmatprep.subr.mxu0 0.0
    %757 = vmatpush1.msra.mxu0 %v662
    %758 = vmatprep.subr.mxu0 0.0
    %759 = vmatpush1.msra.mxu0 %v663
    %760 = vmatprep.subr.mxu0 0.0
    %761 = vmatpush1.msra.mxu0 0.0
    %762 = vmatprep.subr.mxu0 0.0
    %763 = vmatpush1.msra.mxu0 0.0
    %764 = vmatprep.subr.mxu0 0.0
    %765 = vmatpush1.msra.mxu0 0.0
    %766 = vmatprep.subr.mxu0 0.0
    %767 = vmatpush1.msra.mxu0 0.0
    %768 = vmatprep.subr.mxu0 0.0
    %769 = vmatpush1.msra.mxu0 0.0
    %770 = vmatprep.subr.mxu0 0.0
    %771 = vmatpush1.msra.mxu0 0.0
    %772 = vmatprep.subr.mxu0 0.0
    %773 = vmatpush1.msra.mxu0 0.0
    %774 = vmatprep.subr.mxu0 0.0
    %775 = vmatpush1.msra.mxu0 0.0
    %776 = vmatprep.subr.mxu0 0.0
    %777 = vmatpush1.msra.mxu0 0.0
    %778 = vmatprep.subr.mxu0 0.0
    %779 = vmatpush1.msra.mxu0 0.0
    %780 = vmatprep.subr.mxu0 0.0
    %781 = vmatpush1.msra.mxu0 0.0
    %782 = vmatprep.subr.mxu0 0.0
    %783 = vmatpush1.msra.mxu0 0.0
    %784 = vmatprep.subr.mxu0 0.0
    %785 = vmatpush1.msra.mxu0 0.0
    %786 = vmatprep.subr.mxu0 0.0
    %787 = vmatpush1.msra.mxu0 0.0
    %788 = vmatprep.subr.mxu0 0.0
    %789 = vmatpush1.msra.mxu0 0.0
    %790 = vmatprep.subr.mxu0 0.0
    %791 = vmatpush1.msra.mxu0 0.0
    %792 = vmatprep.subr.mxu0 0.0
    %793 = vmatpush1.msra.mxu0 0.0
    %794 = vmatprep.subr.mxu0 0.0
    %795 = vmatpush1.msra.mxu0 0.0
    %796 = vmatprep.subr.mxu0 0.0
    %797 = vmatpush1.msra.mxu0 0.0
    %798 = vmatprep.subr.mxu0 0.0
    %799 = vmatpush1.msra.mxu0 0.0
    %800 = vmatprep.subr.mxu0 0.0
    %801 = vmatpush1.msra.mxu0 0.0
    %802 = vmatprep.subr.mxu0 0.0
    %803 = vmatpush1.msra.mxu0 0.0
    %804 = vmatprep.subr.mxu0 0.0
    %805 = vmatpush1.msra.mxu0 0.0
    %806 = vmatprep.subr.mxu0 0.0
    %807 = vmatpush1.msra.mxu0 0.0
    %808 = vmatprep.subr.mxu0 0.0
    %809 = vmatpush1.msra.mxu0 0.0
    %810 = vmatprep.subr.mxu0 0.0
    %811 = vmatpush1.msra.mxu0 0.0
    %812 = vmatprep.subr.mxu0 0.0
    %813 = vmatpush1.msra.mxu0 0.0
    %814 = vmatprep.subr.mxu0 0.0
    %815 = vmatpush1.msra.mxu0 0.0
    %816 = vmatprep.subr.mxu0 0.0
    %817 = vmatpush1.msra.mxu0 0.0
    %818 = vmatprep.subr.mxu0 0.0
    %819 = vmatpush1.msra.mxu0 0.0
    %820 = vmatprep.mubr.f32.mxu0 0.0
    %821 = vmatmul.mubr.f32.gmra.mrb[0].mxu0 %v299
    %v822 = vpop.f32.mrb[0].mxu0
    %v823 = vadd.f32 0.0, %v822
    %v824 = vpop.f32.mrb[0].mxu0
    %825 = vmatprep.mubr.f32.mxu0 0.0
    %826 = vmatmul.mubr.f32.gmra.mrb[0].mxu0 %v302
    %v827 = vpop.f32.mrb[0].mxu0
    %v828 = vadd.f32 0.0, %v827
    %v829 = vpop.f32.mrb[0].mxu0
    %830 = vdwg.mxu0
    %v831 = vld [vmem:[#allocation6 + $0x98] sm:$0xff]
    %v832 = vld [vmem:[#allocation6 + $0xa0] sm:$0xff]
    %v833 = vld [vmem:[#allocation6 + $0xa8] sm:$0xff]
    %v834 = vld [vmem:[#allocation6 + $0xb0] sm:$0xff]
    %v835 = vld [vmem:[#allocation7 + $0x7] sm:$0x1]
    %v836 = vlaneseq
    %v837 = vshrl.u32 %v836, 7
    %v838 = vsub.s32 0, %v837
    %v839 = vrot.slane %v835, %v838
    %v841 = vsel %vm387, %v823, 0
    %v844 = vsel %vm387, %v828, 0
    %846 = vmatprep.subr.mxu0 0.0
    %847 = vmatpush1.msra.mxu0 %v831
    %848 = vmatprep.subr.mxu0 0.0
    %849 = vmatpush1.msra.mxu0 %v832
    %850 = vmatprep.subr.mxu0 0.0
    %851 = vmatpush1.msra.mxu0 %v833
    %852 = vmatprep.subr.mxu0 0.0
    %853 = vmatpush1.msra.mxu0 %v834
    %854 = vmatprep.subr.mxu0 0.0
    %855 = vmatpush1.msra.mxu0 0.0
    %856 = vmatprep.subr.mxu0 0.0
    %857 = vmatpush1.msra.mxu0 0.0
    %858 = vmatprep.subr.mxu0 0.0
    %859 = vmatpush1.msra.mxu0 0.0
    %860 = vmatprep.subr.mxu0 0.0
    %861 = vmatpush1.msra.mxu0 0.0
    %862 = vmatprep.subr.mxu0 0.0
    %863 = vmatpush1.msra.mxu0 0.0
    %864 = vmatprep.subr.mxu0 0.0
    %865 = vmatpush1.msra.mxu0 0.0
    %866 = vmatprep.subr.mxu0 0.0
    %867 = vmatpush1.msra.mxu0 0.0
    %868 = vmatprep.subr.mxu0 0.0
    %869 = vmatpush1.msra.mxu0 0.0
    %870 = vmatprep.subr.mxu0 0.0
    %871 = vmatpush1.msra.mxu0 0.0
    %872 = vmatprep.subr.mxu0 0.0
    %873 = vmatpush1.msra.mxu0 0.0
    %874 = vmatprep.subr.mxu0 0.0
    %875 = vmatpush1.msra.mxu0 0.0
    %876 = vmatprep.subr.mxu0 0.0
    %877 = vmatpush1.msra.mxu0 0.0
    %878 = vmatprep.subr.mxu0 0.0
    %879 = vmatpush1.msra.mxu0 0.0
    %880 = vmatprep.subr.mxu0 0.0
    %881 = vmatpush1.msra.mxu0 0.0
    %882 = vmatprep.subr.mxu0 0.0
    %883 = vmatpush1.msra.mxu0 0.0
    %884 = vmatprep.subr.mxu0 0.0
    %885 = vmatpush1.msra.mxu0 0.0
    %886 = vmatprep.subr.mxu0 0.0
    %887 = vmatpush1.msra.mxu0 0.0
    %888 = vmatprep.subr.mxu0 0.0
    %889 = vmatpush1.msra.mxu0 0.0
    %890 = vmatprep.subr.mxu0 0.0
    %891 = vmatpush1.msra.mxu0 0.0
    %892 = vmatprep.subr.mxu0 0.0
    %893 = vmatpush1.msra.mxu0 0.0
    %894 = vmatprep.subr.mxu0 0.0
    %895 = vmatpush1.msra.mxu0 0.0
    %896 = vmatprep.subr.mxu0 0.0
    %897 = vmatpush1.msra.mxu0 0.0
    %898 = vmatprep.subr.mxu0 0.0
    %899 = vmatpush1.msra.mxu0 0.0
    %900 = vmatprep.subr.mxu0 0.0
    %901 = vmatpush1.msra.mxu0 0.0
    %902 = vmatprep.subr.mxu0 0.0
    %903 = vmatpush1.msra.mxu0 0.0
    %904 = vmatprep.subr.mxu0 0.0
    %905 = vmatpush1.msra.mxu0 0.0
    %906 = vmatprep.subr.mxu0 0.0
    %907 = vmatpush1.msra.mxu0 0.0
    %908 = vmatprep.subr.mxu0 0.0
    %909 = vmatpush1.msra.mxu0 0.0
    %910 = vmatprep.mubr.f32.mxu0 0.0
    %911 = vmatmul.mubr.f32.gmra.mrb[0].mxu0 %v841
    %v912 = vpop.f32.mrb[0].mxu0
    %v913 = vadd.f32 %v839, %v912
    %v914 = vpop.f32.mrb[0].mxu0
    %915 = vmatprep.mubr.f32.mxu0 0.0
    %916 = vmatmul.mubr.f32.gmra.mrb[0].mxu0 %v844
    %v917 = vpop.f32.mrb[0].mxu0
    %v918 = vadd.f32 %v839, %v917
    %v919 = vpop.f32.mrb[0].mxu0
    %920 = vdwg.mxu0
    %v921 = vmax.f32 %v913, 0.0
    %v922 = vmax.f32 %v918, 0.0
    %v923 = vld [vmem:[#allocation6 + $0xb8] sm:$0xff]
    %v924 = vld [vmem:[#allocation6 + $0xc0] sm:$0xff]
    %v925 = vld [vmem:[#allocation6 + $0xc8] sm:$0xff]
    %v926 = vld [vmem:[#allocation6 + $0xd0] sm:$0xff]
    %v927 = vld [vmem:[#allocation6 + $0xd8] sm:$0xff]
    %v928 = vld [vmem:[#allocation6 + $0xe0] sm:$0xff]
    %v929 = vld [vmem:[#allocation6 + $0xe8] sm:$0xff]
    %v930 = vld [vmem:[#allocation6 + $0xf0] sm:$0xff]
    %v931 = vld [vmem:[#allocation7 + $0x8] sm:$0x1]
    %v932 = vlaneseq
    %v933 = vshrl.u32 %v932, 7
    %v934 = vsub.s32 0, %v933
    %v935 = vrot.slane %v931, %v934
    %vm936 = vcmask 523264
    %v938 = vsel %vm936, %v754, 0
    %v941 = vsel %vm936, %v755, 0
    %943 = vmatprep.subr.mxu0 0.0
    %944 = vmatpush1.msra.mxu0 %v923
    %945 = vmatprep.subr.mxu0 0.0
    %946 = vmatpush1.msra.mxu0 %v924
    %947 = vmatprep.subr.mxu0 0.0
    %948 = vmatpush1.msra.mxu0 %v925
    %949 = vmatprep.subr.mxu0 0.0
    %950 = vmatpush1.msra.mxu0 %v926
    %951 = vmatprep.subr.mxu0 0.0
    %952 = vmatpush1.msra.mxu0 %v927
    %953 = vmatprep.subr.mxu0 0.0
    %954 = vmatpush1.msra.mxu0 %v928
    %955 = vmatprep.subr.mxu0 0.0
    %956 = vmatpush1.msra.mxu0 %v929
    %957 = vmatprep.subr.mxu0 0.0
    %958 = vmatpush1.msra.mxu0 %v930
    %959 = vmatprep.subr.mxu0 0.0
    %960 = vmatpush1.msra.mxu0 0.0
    %961 = vmatprep.subr.mxu0 0.0
    %962 = vmatpush1.msra.mxu0 0.0
    %963 = vmatprep.subr.mxu0 0.0
    %964 = vmatpush1.msra.mxu0 0.0
    %965 = vmatprep.subr.mxu0 0.0
    %966 = vmatpush1.msra.mxu0 0.0
    %967 = vmatprep.subr.mxu0 0.0
    %968 = vmatpush1.msra.mxu0 0.0
    %969 = vmatprep.subr.mxu0 0.0
    %970 = vmatpush1.msra.mxu0 0.0
    %971 = vmatprep.subr.mxu0 0.0
    %972 = vmatpush1.msra.mxu0 0.0
    %973 = vmatprep.subr.mxu0 0.0
    %974 = vmatpush1.msra.mxu0 0.0
    %975 = vmatprep.subr.mxu0 0.0
    %976 = vmatpush1.msra.mxu0 0.0
    %977 = vmatprep.subr.mxu0 0.0
    %978 = vmatpush1.msra.mxu0 0.0
    %979 = vmatprep.subr.mxu0 0.0
    %980 = vmatpush1.msra.mxu0 0.0
    %981 = vmatprep.subr.mxu0 0.0
    %982 = vmatpush1.msra.mxu0 0.0
    %983 = vmatprep.subr.mxu0 0.0
    %984 = vmatpush1.msra.mxu0 0.0
    %985 = vmatprep.subr.mxu0 0.0
    %986 = vmatpush1.msra.mxu0 0.0
    %987 = vmatprep.subr.mxu0 0.0
    %988 = vmatpush1.msra.mxu0 0.0
    %989 = vmatprep.subr.mxu0 0.0
    %990 = vmatpush1.msra.mxu0 0.0
    %991 = vmatprep.subr.mxu0 0.0
    %992 = vmatpush1.msra.mxu0 0.0
    %993 = vmatprep.subr.mxu0 0.0
    %994 = vmatpush1.msra.mxu0 0.0
    %995 = vmatprep.subr.mxu0 0.0
    %996 = vmatpush1.msra.mxu0 0.0
    %997 = vmatprep.subr.mxu0 0.0
    %998 = vmatpush1.msra.mxu0 0.0
    %999 = vmatprep.subr.mxu0 0.0
    %1000 = vmatpush1.msra.mxu0 0.0
    %1001 = vmatprep.subr.mxu0 0.0
    %1002 = vmatpush1.msra.mxu0 0.0
    %1003 = vmatprep.subr.mxu0 0.0
    %1004 = vmatpush1.msra.mxu0 0.0
    %1005 = vmatprep.subr.mxu0 0.0
    %1006 = vmatpush1.msra.mxu0 0.0
    %1007 = vmatprep.mubr.f32.mxu0 0.0
    %1008 = vmatmul.mubr.f32.gmra.mrb[0].mxu0 %v938
    %v1009 = vpop.f32.mrb[0].mxu0
    %v1010 = vadd.f32 %v935, %v1009
    %v1011 = vpop.f32.mrb[0].mxu0
    %1012 = vmatprep.mubr.f32.mxu0 0.0
    %1013 = vmatmul.mubr.f32.gmra.mrb[0].mxu0 %v941
    %v1014 = vpop.f32.mrb[0].mxu0
    %v1015 = vadd.f32 %v935, %v1014
    %v1016 = vpop.f32.mrb[0].mxu0
    %1017 = vdwg.mxu0
    %v1018 = vmax.f32 %v1010, 0.0
    %v1019 = vmax.f32 %v1015, 0.0
    %1022 = vrot.lane.b32.xlu0 %v1018, 96
    %v1023 = vpop.permute.xlu0 %1022
    %1024 = vrot.lane.b32.xlu0 %v1019, 96
    %v1025 = vpop.permute.xlu0 %1024
    %v1028 = vadd.f32 %v1018, %v1023
    %v1029 = vadd.f32 %v1019, %v1025
    %v1030 = vadd.f32 %v1028, %v921
    %v1031 = vadd.f32 %v1029, %v922
    %v1032 = vmul.f32 %v1030, 0.33333334
    %v1033 = vmul.f32 %v1031, 0.33333334
    %v1034 = vld [vmem:[#allocation6 + $0xf8] sm:$0xff]
    %v1035 = vld [vmem:[#allocation6 + $0x100] sm:$0xff]
    %v1036 = vld [vmem:[#allocation6 + $0x108] sm:$0xff]
    %v1037 = vld [vmem:[#allocation6 + $0x110] sm:$0xff]
    %v1038 = vld [vmem:[#allocation7 + $0x9] sm:$0x1]
    %v1039 = vlaneseq
    %v1040 = vshrl.u32 %v1039, 7
    %v1041 = vsub.s32 0, %v1040
    %v1042 = vrot.slane %v1038, %v1041
    %v1044 = vsel %vm387, %v1032, 0
    %v1047 = vsel %vm387, %v1033, 0
    %1049 = vmatprep.subr.mxu0 0.0
    %1050 = vmatpush1.msra.mxu0 %v1034
    %1051 = vmatprep.subr.mxu0 0.0
    %1052 = vmatpush1.msra.mxu0 %v1035
    %1053 = vmatprep.subr.mxu0 0.0
    %1054 = vmatpush1.msra.mxu0 %v1036
    %1055 = vmatprep.subr.mxu0 0.0
    %1056 = vmatpush1.msra.mxu0 %v1037
    %1057 = vmatprep.subr.mxu0 0.0
    %1058 = vmatpush1.msra.mxu0 0.0
    %1059 = vmatprep.subr.mxu0 0.0
    %1060 = vmatpush1.msra.mxu0 0.0
    %1061 = vmatprep.subr.mxu0 0.0
    %1062 = vmatpush1.msra.mxu0 0.0
    %1063 = vmatprep.subr.mxu0 0.0
    %1064 = vmatpush1.msra.mxu0 0.0
    %1065 = vmatprep.subr.mxu0 0.0
    %1066 = vmatpush1.msra.mxu0 0.0
    %1067 = vmatprep.subr.mxu0 0.0
    %1068 = vmatpush1.msra.mxu0 0.0
    %1069 = vmatprep.subr.mxu0 0.0
    %1070 = vmatpush1.msra.mxu0 0.0
    %1071 = vmatprep.subr.mxu0 0.0
    %1072 = vmatpush1.msra.mxu0 0.0
    %1073 = vmatprep.subr.mxu0 0.0
    %1074 = vmatpush1.msra.mxu0 0.0
    %1075 = vmatprep.subr.mxu0 0.0
    %1076 = vmatpush1.msra.mxu0 0.0
    %1077 = vmatprep.subr.mxu0 0.0
    %1078 = vmatpush1.msra.mxu0 0.0
    %1079 = vmatprep.subr.mxu0 0.0
    %1080 = vmatpush1.msra.mxu0 0.0
    %1081 = vmatprep.subr.mxu0 0.0
    %1082 = vmatpush1.msra.mxu0 0.0
    %1083 = vmatprep.subr.mxu0 0.0
    %1084 = vmatpush1.msra.mxu0 0.0
    %1085 = vmatprep.subr.mxu0 0.0
    %1086 = vmatpush1.msra.mxu0 0.0
    %1087 = vmatprep.subr.mxu0 0.0
    %1088 = vmatpush1.msra.mxu0 0.0
    %1089 = vmatprep.subr.mxu0 0.0
    %1090 = vmatpush1.msra.mxu0 0.0
    %1091 = vmatprep.subr.mxu0 0.0
    %1092 = vmatpush1.msra.mxu0 0.0
    %1093 = vmatprep.subr.mxu0 0.0
    %1094 = vmatpush1.msra.mxu0 0.0
    %1095 = vmatprep.subr.mxu0 0.0
    %1096 = vmatpush1.msra.mxu0 0.0
    %1097 = vmatprep.subr.mxu0 0.0
    %1098 = vmatpush1.msra.mxu0 0.0
    %1099 = vmatprep.subr.mxu0 0.0
    %1100 = vmatpush1.msra.mxu0 0.0
    %1101 = vmatprep.subr.mxu0 0.0
    %1102 = vmatpush1.msra.mxu0 0.0
    %1103 = vmatprep.subr.mxu0 0.0
    %1104 = vmatpush1.msra.mxu0 0.0
    %1105 = vmatprep.subr.mxu0 0.0
    %1106 = vmatpush1.msra.mxu0 0.0
    %1107 = vmatprep.subr.mxu0 0.0
    %1108 = vmatpush1.msra.mxu0 0.0
    %1109 = vmatprep.subr.mxu0 0.0
    %1110 = vmatpush1.msra.mxu0 0.0
    %1111 = vmatprep.subr.mxu0 0.0
    %1112 = vmatpush1.msra.mxu0 0.0
    %1113 = vmatprep.mubr.f32.mxu0 0.0
    %1114 = vmatmul.mubr.f32.gmra.mrb[0].mxu0 %v1044
    %v1115 = vpop.f32.mrb[0].mxu0
    %v1116 = vadd.f32 %v1042, %v1115
    %v1117 = vpop.f32.mrb[0].mxu0
    %1118 = vmatprep.mubr.f32.mxu0 0.0
    %1119 = vmatmul.mubr.f32.gmra.mrb[0].mxu0 %v1047
    %v1120 = vpop.f32.mrb[0].mxu0
    %v1121 = vadd.f32 %v1042, %v1120
    %v1122 = vpop.f32.mrb[0].mxu0
    %1123 = vdwg.mxu0
    %1126 = vrot.lane.b32.xlu0 %v662, 64
    %v1127 = vpop.permute.xlu0 %1126
    %1128 = vrot.lane.b32.xlu0 %v663, 64
    %v1129 = vpop.permute.xlu0 %1128
    %1134 = vrot.lane.b32.xlu0 %v921, 96
    %v1135 = vpop.permute.xlu0 %1134
    %1136 = vrot.lane.b32.xlu0 %v922, 96
    %v1137 = vpop.permute.xlu0 %1136
    %v1140 = vsel %vm387, %v1032, %v483
    %v1141 = vsel %vm387, %v1033, %v484
    %v1142 = vsel %vm936, %v1140, %v1127
    %v1143 = vsel %vm936, %v1141, %v1129
    %vm1144 = vcmask 785408
    %v1145 = vsel %vm1144, %v1142, %v1135
    %v1146 = vsel %vm1144, %v1143, %v1137
    %vm1147 = vcmask 64512
    %v1148 = vsel %vm1147, %v1116, 0.0
    %v1149 = vsel %vm1147, %v1121, 0.0
    %1150 = vst [vmem:[%s4] sm:$0xff] %v1145
    %1151 = vst [vmem:[%s4 + $0x8] sm:$0xff] %v1148
    %1152 = vst [vmem:[%s4 + $0x10] sm:$0xff] %v1146
    %1153 = vst [vmem:[%s4 + $0x18] sm:$0xff] %v1149
    // Predicated region
    $region34: #{hrnet_gcn_forward.1} parent=1 // pred_check
      _
    $region35: #{hrnet_gcn_forward.1} parent=1 // pred_check_branch
      %1155 = sbr.rel (0) target = $region37
    $region36: #{hrnet_gcn_forward.1} parent=1 // pred_region
      _
    $region37: #{hrnet_gcn_forward.1} parent=1 // pred_fallthru
      _
    // Predicated region
    $region38: #{hrnet_gcn_forward.1} parent=1 // pred_check
      _
    $region39: #{hrnet_gcn_forward.1} parent=1 // pred_check_branch
      %1157 = sbr.rel (0) target = $region41
    $region40: #{hrnet_gcn_forward.1} parent=1 // pred_region
      _
    $region41: #{hrnet_gcn_forward.1} parent=1 // pred_fallthru
      _
    %1158 = vsyncpa [#allocation3], 1
    %1159 = vsyncpa [#allocation5], 1
    %1160 = vsyncpa [#allocation8], 1

</llo_original>
